<compile_context>
chip_gen: v5e
topology: v5e:2x2
jax: 0.10.0
libtpu: 0.0.40
codegen_flags: <defaults>
</compile_context>

<pallas_src>
import functools

import jax
import jax.numpy as jnp
from jax.experimental import pallas as pl
from jax.experimental.pallas import tpu as pltpu


# ------------------------------ Pallas kernel -------------------------------

def _conv_relu_stats_kernel(xp_ref, wkt_ref, bias_ref, out_ref, stats_ref):
    """Per grid step: B images of 3x3 conv (block-Toeplitz) + bias + ReLU,
    plus per-(w, c_out) partial sums for the BatchNorm batch statistics."""
    b, h, wco = out_ref.shape                 # (B, H, W*C_out), all static

    s = jnp.zeros((1, wco), jnp.float32)
    sq = jnp.zeros((1, wco), jnp.float32)

    for img in range(b):                      # static unroll over per-step batch
        # 3x3 conv as 3 block-Toeplitz matmuls over shifted full row windows
        # (kx folded into the weight).  Accumulator starts from the first dot.
        acc = jnp.dot(xp_ref[img, 0:h, :], wkt_ref[0],
                      preferred_element_type=jnp.float32)
        acc = acc + jnp.dot(xp_ref[img, 1:h + 1, :], wkt_ref[1],
                            preferred_element_type=jnp.float32)
        acc = acc + jnp.dot(xp_ref[img, 2:h + 2, :], wkt_ref[2],
                            preferred_element_type=jnp.float32)

        y = jnp.maximum(acc + bias_ref[...], 0.0)       # bias + ReLU, f32
        out_ref[img] = y                                 # lane-dense store

        s = s + jnp.sum(y, axis=0, keepdims=True)
        sq = sq + jnp.sum(y * y, axis=0, keepdims=True)

    # TODO(synk): for very large N*H*W, switch to a shifted/Welford variant —
    # the one-pass E[y^2]-E[y]^2 can cancel in f32 when var << mean^2.
    stats_ref[0] = jnp.concatenate([s, sq], axis=0)      # (2, W*C_out)


# --------------------------- host-side planning -----------------------------

def _tile_bytes(shape, itemsize):
    """Approximate VMEM bytes for one buffer of `shape` ((8,128)-padded)."""
    lead = 1
    for d in shape[:-2]:
        lead *= d
    rows = -(-shape[-2] // 8) * 8
    cols = -(-shape[-1] // 128) * 128
    return lead * rows * cols * itemsize


def _plan(n, h, w, c_in, c_out, mm_itemsize):
    """Pick images-per-step B and an explicit VMEM budget (v7x-safe)."""
    target = 48 * 1024 * 1024                 # headroom under v7x's 64 MiB VMEM
    wco = w * c_out
    fixed = (2 * _tile_bytes((3, (w + 2) * c_in, wco), mm_itemsize)   # weight
             + 2 * _tile_bytes((1, wco), 4)                           # bias row
             + 2 * _tile_bytes((2, wco), 4))                          # stats out
    per_img = (2 * _tile_bytes((h + 2, (w + 2) * c_in), mm_itemsize)  # input
               + 2 * _tile_bytes((h, wco), 4))                        # output
    bb = 1
    for cand in range(1, min(n, 8) + 1):
        if n % cand == 0 and fixed + cand * per_img <= target:
            bb = cand
    total = fixed + bb * per_img
    vmem_limit = min(int(total * 1.25) + (4 << 20), 128 << 20)
    return bb, vmem_limit


# --------------------------- weight preparation -----------------------------

def prepare_conv_weight(weight, w):
    """(C_out, C_in, 3, 3) -> block-Toeplitz (3, (W+2)*C_in, W*C_out).

    Depends only on `weight`; build once and reuse across calls."""
    c_out, c_in, kh, kw = weight.shape
    assert (kh, kw) == (3, 3)
    wk = jnp.transpose(weight.astype(jnp.float32), (2, 3, 1, 0))   # (ky,kx,c,f)
    i = jnp.arange(w + 2)
    j = jnp.arange(w)
    kx = jnp.arange(3)
    sel = (i[None, :, None] == j[None, None, :] + kx[:, None, None])
    sel = sel.astype(jnp.float32)                                   # (3, W+2, W)
    wkt = jnp.einsum("xij,yxcf->yicjf", sel, wk)
    return wkt.reshape(3, (w + 2) * c_in, w * c_out)


# ------------------------------ host wrapper --------------------------------

@functools.partial(jax.jit, static_argnames=("eps", "use_bf16_matmul"))
def output_convolution_block(x, wkt, bias, gamma, beta, eps=1e-5,
                             use_bf16_matmul=False):
    """x: (N, C_in, H, W); wkt: prepare_conv_weight(weight, W).  Returns NCHW."""
    n, c_in, h, w = x.shape
    wco = wkt.shape[-1]
    c_out = wco // w

    mm_dtype = jnp.bfloat16 if use_bf16_matmul else jnp.float32

    # Pad spatially and go NCHW -> row-flattened NHWC: one cheap fused XLA pass
    # over the input, no im2col expansion anywhere.
    xp = jnp.pad(x.astype(jnp.float32), ((0, 0), (0, 0), (1, 1), (1, 1)))
    xp = jnp.transpose(xp, (0, 2, 3, 1)).reshape(n, h + 2, (w + 2) * c_in)
    xp = xp.astype(mm_dtype)
    wkt_mm = wkt.astype(mm_dtype)
    bias_row = jnp.tile(bias.astype(jnp.float32), w).reshape(1, wco)

    bb, vmem_limit = _plan(n, h, w, c_in, c_out, jnp.dtype(mm_dtype).itemsize)
    n_steps = n // bb

    out, stats = pl.pallas_call(
        _conv_relu_stats_kernel,
        out_shape=(
            jax.ShapeDtypeStruct((n, h, wco), jnp.float32),        # activations
            jax.ShapeDtypeStruct((n_steps, 2, wco), jnp.float32),  # per-step stats
        ),
        grid_spec=pltpu.PrefetchScalarGridSpec(
            num_scalar_prefetch=0,
            grid=(n_steps,),
            in_specs=[
                pl.BlockSpec((bb, h + 2, (w + 2) * c_in), lambda i: (i, 0, 0)),
                pl.BlockSpec((3, (w + 2) * c_in, wco), lambda i: (0, 0, 0)),
                pl.BlockSpec((1, wco), lambda i: (0, 0)),
            ],
            out_specs=[
                pl.BlockSpec((bb, h, wco), lambda i: (i, 0, 0)),
                pl.BlockSpec((1, 2, wco), lambda i: (i, 0, 0)),
            ],
        ),
        compiler_params=pltpu.CompilerParams(
            # Per-step output blocks + per-step partial stats => no cross-step
            # state, so the batch axis is parallel (both TCs on v7x).
            dimension_semantics=("parallel",),
            vmem_limit_bytes=vmem_limit,
        ),
    )(xp, wkt_mm, bias_row)

    # ---- BatchNorm (training-mode batch stats) fused into the epilogue -----
    cnt = float(n * h * w)
    totals = stats.sum(axis=0).reshape(2, w, c_out).sum(axis=1)    # (2, C_out)
    mean = totals[0] / cnt
    var = jnp.maximum(totals[1] / cnt - mean * mean, 0.0)          # clamp >= 0
    scale = gamma.astype(jnp.float32) * jax.lax.rsqrt(var + eps)   # (C_out,)
    shift = beta.astype(jnp.float32) - mean * scale

    # y*scale+shift fused into the reshape/transpose XLA already has to do.
    y = out.reshape(n, h, w, c_out) * scale + shift
    return jnp.transpose(y, (0, 3, 1, 2))                          # NCHW


# --------------------------- pure-JAX reference -----------------------------

def _reference(x, weight, bias, gamma, beta, eps=1e-5):
    y = jax.lax.conv_general_dilated(
        x.astype(jnp.float32), weight.astype(jnp.float32),
        window_strides=(1, 1), padding=((1, 1), (1, 1)),
        dimension_numbers=("NCHW", "OIHW", "NCHW"))
    y = y + bias.reshape(1, -1, 1, 1)
    y = jnp.maximum(y, 0.0)
    mean = jnp.mean(y, axis=(0, 2, 3), keepdims=True)
    var = jnp.mean((y - mean) ** 2, axis=(0, 2, 3), keepdims=True)  # biased
    return (y - mean) * jax.lax.rsqrt(var + eps) * gamma.reshape(1, -1, 1, 1) \
        + beta.reshape(1, -1, 1, 1)


# ------------------------------------ main -----------------------------------

if __name__ == "__main__":
    key = jax.random.PRNGKey(0)
    k_x, k_w, k_b, k_g, k_be = jax.random.split(key, 5)

    N, C_IN, C_OUT, H, W = 2, 4, 8, 16, 16

    x = jax.random.normal(k_x, (N, C_IN, H, W), dtype=jnp.float32)

    # Deterministic synthetic parameters (Conv2d + BatchNorm2d shapes).
    fan_in = C_IN * 3 * 3
    weight = jax.random.normal(k_w, (C_OUT, C_IN, 3, 3), jnp.float32) / jnp.sqrt(fan_in)
    bias = jax.random.normal(k_b, (C_OUT,), jnp.float32) * 0.1
    gamma = 1.0 + 0.1 * jax.random.normal(k_g, (C_OUT,), jnp.float32)
    beta = 0.1 * jax.random.normal(k_be, (C_OUT,), jnp.float32)

    # Built once, reusable across calls (depends only on `weight`).
    wkt = prepare_conv_weight(weight, W)

    out = output_convolution_block(x, wkt, bias, gamma, beta)
    out = jax.block_until_ready(out)

    ref = _reference(x, weight, bias, gamma, beta)
    assert out.shape == (N, C_OUT, H, W)
    assert jnp.allclose(out, ref, rtol=1e-3, atol=1e-3), \
        f"max err {jnp.max(jnp.abs(out - ref))}"

    print("KERNEL_OK")
</pallas_src>

<mosaic_0001>
module attributes {stable_mosaic.version = 11 : i64} {
  func.func @_conv_relu_stats_kernel(%arg0: i32, %arg1: memref<2x18x72xf32, #tpu.memory_space<vmem>>, %arg2: memref<3x72x128xf32, #tpu.memory_space<vmem>>, %arg3: memref<1x128xf32, #tpu.memory_space<vmem>>, %arg4: memref<2x16x128xf32, #tpu.memory_space<vmem>>, %arg5: memref<1x2x128xf32, #tpu.memory_space<vmem>>) attributes {dimension_semantics = [#tpu.dimension_semantics<parallel>], iteration_bounds = array<i64: 1>, scalar_prefetch = 0 : i64, scratch_operands = 0 : i64, tpu.core_type = #tpu.core_type<tc>, window_params = [{transform_indices = @transform_0, window_bounds = array<i64: 2, 18, 72>}, {pipeline_mode = #tpu.pipeline_mode<synchronous>, transform_indices = @transform_1, window_bounds = array<i64: 3, 72, 128>}, {pipeline_mode = #tpu.pipeline_mode<synchronous>, transform_indices = @transform_2, window_bounds = array<i64: 1, 128>}, {transform_indices = @transform_3, window_bounds = array<i64: 2, 16, 128>}, {transform_indices = @transform_4, window_bounds = array<i64: 1, 2, 128>}]} {
    %cst = arith.constant 0.000000e+00 : f32
    %0 = vector.broadcast %cst : f32 to vector<1x128xf32>
    %cst_0 = arith.constant 0.000000e+00 : f32
    %1 = vector.broadcast %cst_0 : f32 to vector<1x128xf32>
    %c0 = arith.constant 0 : index
    %c0_1 = arith.constant 0 : index
    %c0_2 = arith.constant 0 : index
    %2 = vector.load %arg1[%c0, %c0_1, %c0_2] : memref<2x18x72xf32, #tpu.memory_space<vmem>>, vector<1x16x72xf32>
    %3 = vector.shape_cast %2 : vector<1x16x72xf32> to vector<16x72xf32>
    %c0_3 = arith.constant 0 : index
    %c0_4 = arith.constant 0 : index
    %c0_5 = arith.constant 0 : index
    %4 = vector.load %arg2[%c0_3, %c0_4, %c0_5] : memref<3x72x128xf32, #tpu.memory_space<vmem>>, vector<1x72x128xf32>
    %5 = vector.shape_cast %4 : vector<1x72x128xf32> to vector<72x128xf32>
    %cst_6 = arith.constant dense<0.000000e+00> : vector<16x128xf32>
    %6 = tpu.matmul %3, %5, %cst_6 {dimension_numbers = #tpu.dot_dimension_numbers<[1], [0], [0], [1], [0, 0, 1, 1], [], []>} : vector<16x72xf32>, vector<72x128xf32>, vector<16x128xf32> -> vector<16x128xf32>
    %c0_7 = arith.constant 0 : index
    %c1 = arith.constant 1 : index
    %c0_8 = arith.constant 0 : index
    %7 = vector.load %arg1[%c0_7, %c1, %c0_8] : memref<2x18x72xf32, #tpu.memory_space<vmem>>, vector<1x16x72xf32>
    %8 = vector.shape_cast %7 : vector<1x16x72xf32> to vector<16x72xf32>
    %c1_9 = arith.constant 1 : index
    %c0_10 = arith.constant 0 : index
    %c0_11 = arith.constant 0 : index
    %9 = vector.load %arg2[%c1_9, %c0_10, %c0_11] : memref<3x72x128xf32, #tpu.memory_space<vmem>>, vector<1x72x128xf32>
    %10 = vector.shape_cast %9 : vector<1x72x128xf32> to vector<72x128xf32>
    %cst_12 = arith.constant dense<0.000000e+00> : vector<16x128xf32>
    %11 = tpu.matmul %8, %10, %cst_12 {dimension_numbers = #tpu.dot_dimension_numbers<[1], [0], [0], [1], [0, 0, 1, 1], [], []>} : vector<16x72xf32>, vector<72x128xf32>, vector<16x128xf32> -> vector<16x128xf32>
    %12 = arith.addf %6, %11 : vector<16x128xf32>
    %c0_13 = arith.constant 0 : index
    %c2 = arith.constant 2 : index
    %c0_14 = arith.constant 0 : index
    %13 = vector.load %arg1[%c0_13, %c2, %c0_14] : memref<2x18x72xf32, #tpu.memory_space<vmem>>, vector<1x16x72xf32>
    %14 = vector.shape_cast %13 : vector<1x16x72xf32> to vector<16x72xf32>
    %c2_15 = arith.constant 2 : index
    %c0_16 = arith.constant 0 : index
    %c0_17 = arith.constant 0 : index
    %15 = vector.load %arg2[%c2_15, %c0_16, %c0_17] : memref<3x72x128xf32, #tpu.memory_space<vmem>>, vector<1x72x128xf32>
    %16 = vector.shape_cast %15 : vector<1x72x128xf32> to vector<72x128xf32>
    %cst_18 = arith.constant dense<0.000000e+00> : vector<16x128xf32>
    %17 = tpu.matmul %14, %16, %cst_18 {dimension_numbers = #tpu.dot_dimension_numbers<[1], [0], [0], [1], [0, 0, 1, 1], [], []>} : vector<16x72xf32>, vector<72x128xf32>, vector<16x128xf32> -> vector<16x128xf32>
    %18 = arith.addf %12, %17 : vector<16x128xf32>
    %c0_19 = arith.constant 0 : index
    %c0_20 = arith.constant 0 : index
    %19 = vector.load %arg3[%c0_19, %c0_20] : memref<1x128xf32, #tpu.memory_space<vmem>>, vector<1x128xf32>
    %20 = vector.broadcast %19 : vector<1x128xf32> to vector<16x128xf32>
    %21 = arith.addf %18, %20 : vector<16x128xf32>
    %cst_21 = arith.constant 0.000000e+00 : f32
    %22 = vector.broadcast %cst_21 : f32 to vector<16x128xf32>
    %23 = arith.maximumf %21, %22 : vector<16x128xf32>
    %c0_22 = arith.constant 0 : index
    %c0_23 = arith.constant 0 : index
    %c0_24 = arith.constant 0 : index
    %24 = vector.load %arg4[%c0_22, %c0_23, %c0_24] : memref<2x16x128xf32, #tpu.memory_space<vmem>>, vector<1x16x128xf32>
    %25 = vector.shape_cast %24 : vector<1x16x128xf32> to vector<16x128xf32>
    %26 = vector.shape_cast %23 : vector<16x128xf32> to vector<1x16x128xf32>
    tpu.vector_store %arg4[%c0_22, %c0_23, %c0_24], %26 {strides = array<i32>} : memref<2x16x128xf32, #tpu.memory_space<vmem>>, vector<1x16x128xf32>,
    %cst_25 = arith.constant dense<0.000000e+00> : vector<128xf32>
    %27 = vector.multi_reduction <add>, %23, %cst_25 [0] : vector<16x128xf32> to vector<128xf32>
    %28 = vector.shape_cast %27 : vector<128xf32> to vector<1x128xf32>
    %29 = arith.addf %0, %28 : vector<1x128xf32>
    %30 = arith.mulf %23, %23 : vector<16x128xf32>
    %cst_26 = arith.constant dense<0.000000e+00> : vector<128xf32>
    %31 = vector.multi_reduction <add>, %30, %cst_26 [0] : vector<16x128xf32> to vector<128xf32>
    %32 = vector.shape_cast %31 : vector<128xf32> to vector<1x128xf32>
    %33 = arith.addf %1, %32 : vector<1x128xf32>
    %c1_27 = arith.constant 1 : index
    %c0_28 = arith.constant 0 : index
    %c0_29 = arith.constant 0 : index
    %34 = vector.load %arg1[%c1_27, %c0_28, %c0_29] : memref<2x18x72xf32, #tpu.memory_space<vmem>>, vector<1x16x72xf32>
    %35 = vector.shape_cast %34 : vector<1x16x72xf32> to vector<16x72xf32>
    %c0_30 = arith.constant 0 : index
    %c0_31 = arith.constant 0 : index
    %c0_32 = arith.constant 0 : index
    %36 = vector.load %arg2[%c0_30, %c0_31, %c0_32] : memref<3x72x128xf32, #tpu.memory_space<vmem>>, vector<1x72x128xf32>
    %37 = vector.shape_cast %36 : vector<1x72x128xf32> to vector<72x128xf32>
    %cst_33 = arith.constant dense<0.000000e+00> : vector<16x128xf32>
    %38 = tpu.matmul %35, %37, %cst_33 {dimension_numbers = #tpu.dot_dimension_numbers<[1], [0], [0], [1], [0, 0, 1, 1], [], []>} : vector<16x72xf32>, vector<72x128xf32>, vector<16x128xf32> -> vector<16x128xf32>
    %c1_34 = arith.constant 1 : index
    %c1_35 = arith.constant 1 : index
    %c0_36 = arith.constant 0 : index
    %39 = vector.load %arg1[%c1_34, %c1_35, %c0_36] : memref<2x18x72xf32, #tpu.memory_space<vmem>>, vector<1x16x72xf32>
    %40 = vector.shape_cast %39 : vector<1x16x72xf32> to vector<16x72xf32>
    %c1_37 = arith.constant 1 : index
    %c0_38 = arith.constant 0 : index
    %c0_39 = arith.constant 0 : index
    %41 = vector.load %arg2[%c1_37, %c0_38, %c0_39] : memref<3x72x128xf32, #tpu.memory_space<vmem>>, vector<1x72x128xf32>
    %42 = vector.shape_cast %41 : vector<1x72x128xf32> to vector<72x128xf32>
    %cst_40 = arith.constant dense<0.000000e+00> : vector<16x128xf32>
    %43 = tpu.matmul %40, %42, %cst_40 {dimension_numbers = #tpu.dot_dimension_numbers<[1], [0], [0], [1], [0, 0, 1, 1], [], []>} : vector<16x72xf32>, vector<72x128xf32>, vector<16x128xf32> -> vector<16x128xf32>
    %44 = arith.addf %38, %43 : vector<16x128xf32>
    %c1_41 = arith.constant 1 : index
    %c2_42 = arith.constant 2 : index
    %c0_43 = arith.constant 0 : index
    %45 = vector.load %arg1[%c1_41, %c2_42, %c0_43] : memref<2x18x72xf32, #tpu.memory_space<vmem>>, vector<1x16x72xf32>
    %46 = vector.shape_cast %45 : vector<1x16x72xf32> to vector<16x72xf32>
    %c2_44 = arith.constant 2 : index
    %c0_45 = arith.constant 0 : index
    %c0_46 = arith.constant 0 : index
    %47 = vector.load %arg2[%c2_44, %c0_45, %c0_46] : memref<3x72x128xf32, #tpu.memory_space<vmem>>, vector<1x72x128xf32>
    %48 = vector.shape_cast %47 : vector<1x72x128xf32> to vector<72x128xf32>
    %cst_47 = arith.constant dense<0.000000e+00> : vector<16x128xf32>
    %49 = tpu.matmul %46, %48, %cst_47 {dimension_numbers = #tpu.dot_dimension_numbers<[1], [0], [0], [1], [0, 0, 1, 1], [], []>} : vector<16x72xf32>, vector<72x128xf32>, vector<16x128xf32> -> vector<16x128xf32>
    %50 = arith.addf %44, %49 : vector<16x128xf32>
    %c0_48 = arith.constant 0 : index
    %c0_49 = arith.constant 0 : index
    %51 = vector.load %arg3[%c0_48, %c0_49] : memref<1x128xf32, #tpu.memory_space<vmem>>, vector<1x128xf32>
    %52 = vector.broadcast %51 : vector<1x128xf32> to vector<16x128xf32>
    %53 = arith.addf %50, %52 : vector<16x128xf32>
    %cst_50 = arith.constant 0.000000e+00 : f32
    %54 = vector.broadcast %cst_50 : f32 to vector<16x128xf32>
    %55 = arith.maximumf %53, %54 : vector<16x128xf32>
    %c1_51 = arith.constant 1 : index
    %c0_52 = arith.constant 0 : index
    %c0_53 = arith.constant 0 : index
    %56 = vector.load %arg4[%c1_51, %c0_52, %c0_53] : memref<2x16x128xf32, #tpu.memory_space<vmem>>, vector<1x16x128xf32>
    %57 = vector.shape_cast %56 : vector<1x16x128xf32> to vector<16x128xf32>
    %58 = vector.shape_cast %55 : vector<16x128xf32> to vector<1x16x128xf32>
    tpu.vector_store %arg4[%c1_51, %c0_52, %c0_53], %58 {strides = array<i32>} : memref<2x16x128xf32, #tpu.memory_space<vmem>>, vector<1x16x128xf32>,
    %cst_54 = arith.constant dense<0.000000e+00> : vector<128xf32>
    %59 = vector.multi_reduction <add>, %55, %cst_54 [0] : vector<16x128xf32> to vector<128xf32>
    %60 = vector.shape_cast %59 : vector<128xf32> to vector<1x128xf32>
    %61 = arith.addf %29, %60 : vector<1x128xf32>
    %62 = arith.mulf %55, %55 : vector<16x128xf32>
    %cst_55 = arith.constant dense<0.000000e+00> : vector<128xf32>
    %63 = vector.multi_reduction <add>, %62, %cst_55 [0] : vector<16x128xf32> to vector<128xf32>
    %64 = vector.shape_cast %63 : vector<128xf32> to vector<1x128xf32>
    %65 = arith.addf %33, %64 : vector<1x128xf32>
    %66 = tpu.concatenate %61, %65 in 0 : vector<1x128xf32>, vector<1x128xf32> -> vector<2x128xf32>
    %c0_56 = arith.constant 0 : index
    %c0_57 = arith.constant 0 : index
    %c0_58 = arith.constant 0 : index
    %67 = vector.load %arg5[%c0_56, %c0_57, %c0_58] : memref<1x2x128xf32, #tpu.memory_space<vmem>>, vector<1x2x128xf32>
    %68 = vector.shape_cast %67 : vector<1x2x128xf32> to vector<2x128xf32>
    %69 = vector.shape_cast %66 : vector<2x128xf32> to vector<1x2x128xf32>
    tpu.vector_store %arg5[%c0_56, %c0_57, %c0_58], %69 {strides = array<i32>} : memref<1x2x128xf32, #tpu.memory_space<vmem>>, vector<1x2x128xf32>,
    return
  }
  func.func @transform_0(%arg0: i32) -> (i32, i32, i32) {
    %c0_i32 = arith.constant 0 : i32
    %c0_i32_0 = arith.constant 0 : i32
    %c0_i32_1 = arith.constant 0 : i32
    return %arg0, %c0_i32, %c0_i32_0 : i32, i32, i32
  }
  func.func @transform_1(%arg0: i32) -> (i32, i32, i32) {
    %c0_i32 = arith.constant 0 : i32
    %c0_i32_0 = arith.constant 0 : i32
    %c0_i32_1 = arith.constant 0 : i32
    %c0_i32_2 = arith.constant 0 : i32
    return %c0_i32, %c0_i32_0, %c0_i32_1 : i32, i32, i32
  }
  func.func @transform_2(%arg0: i32) -> (i32, i32) {
    %c0_i32 = arith.constant 0 : i32
    %c0_i32_0 = arith.constant 0 : i32
    %c0_i32_1 = arith.constant 0 : i32
    return %c0_i32, %c0_i32_0 : i32, i32
  }
  func.func @transform_3(%arg0: i32) -> (i32, i32, i32) {
    %c0_i32 = arith.constant 0 : i32
    %c0_i32_0 = arith.constant 0 : i32
    %c0_i32_1 = arith.constant 0 : i32
    return %arg0, %c0_i32, %c0_i32_0 : i32, i32, i32
  }
  func.func @transform_4(%arg0: i32) -> (i32, i32, i32) {
    %c0_i32 = arith.constant 0 : i32
    %c0_i32_0 = arith.constant 0 : i32
    %c0_i32_1 = arith.constant 0 : i32
    return %arg0, %c0_i32, %c0_i32_0 : i32, i32, i32
  }
}

</mosaic_0001>

<llo_original>
// kernel: tile.8
$region0: #{tile.8}
  #allocation0 [shape = 's32[1]{0}', space=sflag, size = 0x4, scoped, tag = 'scoped memory for tile.8']
  %s0 = inlined_call_operand.vmem [shape: f32[8], index: 0, kind: input, shape index: {}]
  %s1 = inlined_call_operand.vmem [shape: f32[16,8], index: 1, kind: output, shape index: {}]
  // Predicated region
  $region2: #{tile.8} parent=0 // pred_check
    _
  $region3: #{tile.8} parent=0 // pred_check_branch
    %3 = sbr.rel (0) target = $region5
  $region4: #{tile.8} parent=0 // pred_region
    _
  $region5: #{tile.8} parent=0 // pred_fallthru
    _
  %v4 = vld [vmem:[%s0] ss:$0 sm:$0xff]
  %5 = vst [vmem:[%s1] sm:$0xff] %v4
  %s6 = scalar_lea.vmem %s1, 8
  %7 = vst [vmem:[%s6] sm:$0xff] %v4

// kernel: tile.9
$region0: #{tile.9}
  %s0 = inlined_call_operand.vmem [shape: f32[16,8], index: 0, kind: input, shape index: {}]
  %s1 = inlined_call_operand.vmem [shape: f32[1,128], index: 1, kind: output, shape index: {}]
  $region1: #{tile.9} parent=0
    #allocation0 [shape = 'u8[4096]{0}', space=vmem, size = 0x1000, scoped, tag = 'scoped mem for output reshape']
    %v2 = vld [vmem:[%s0] sm:$0x1]
    %vm3 = vcmask 64512
    %4 = vst.msk [vmem:[#allocation0] sm:$0x1] %vm3, %v2
    %s5 = scalar_lea.vmem %s0, 15
    %v6 = vld [vmem:[%s5] sm:$0x1]
    %7 = vrot.lane.b32.xlu0 %v6, 120
    %v8 = vpop.permute.xlu0 %7
    %vm9 = vcmask 1048512
    %10 = vst.msk [vmem:[#allocation0] sm:$0x1] %vm9, %v8
    %s11 = scalar_lea.vmem %s0, 14
    %v12 = vld [vmem:[%s11] sm:$0x1]
    %13 = vrot.lane.b32.xlu0 %v12, 112
    %v14 = vpop.permute.xlu0 %13
    %vm15 = vcmask 982912
    %16 = vst.msk [vmem:[#allocation0] sm:$0x1] %vm15, %v14
    %s17 = scalar_lea.vmem %s0, 13
    %v18 = vld [vmem:[%s17] sm:$0x1]
    %19 = vrot.lane.b32.xlu0 %v18, 104
    %v20 = vpop.permute.xlu0 %19
    %vm21 = vcmask 917312
    %22 = vst.msk [vmem:[#allocation0] sm:$0x1] %vm21, %v20
    %s23 = scalar_lea.vmem %s0, 12
    %v24 = vld [vmem:[%s23] sm:$0x1]
    %25 = vrot.lane.b32.xlu0 %v24, 96
    %v26 = vpop.permute.xlu0 %25
    %vm27 = vcmask 851712
    %28 = vst.msk [vmem:[#allocation0] sm:$0x1] %vm27, %v26
    %s29 = scalar_lea.vmem %s0, 11
    %v30 = vld [vmem:[%s29] sm:$0x1]
    %31 = vrot.lane.b32.xlu0 %v30, 88
    %v32 = vpop.permute.xlu0 %31
    %vm33 = vcmask 786112
    %34 = vst.msk [vmem:[#allocation0] sm:$0x1] %vm33, %v32
    %s35 = scalar_lea.vmem %s0, 10
    %v36 = vld [vmem:[%s35] sm:$0x1]
    %37 = vrot.lane.b32.xlu0 %v36, 80
    %v38 = vpop.permute.xlu0 %37
    %vm39 = vcmask 720512
    %40 = vst.msk [vmem:[#allocation0] sm:$0x1] %vm39, %v38
    %s41 = scalar_lea.vmem %s0, 9
    %v42 = vld [vmem:[%s41] sm:$0x1]
    %43 = vrot.lane.b32.xlu0 %v42, 72
    %v44 = vpop.permute.xlu0 %43
    %vm45 = vcmask 654912
    %46 = vst.msk [vmem:[#allocation0] sm:$0x1] %vm45, %v44
    %s47 = scalar_lea.vmem %s0, 8
    %v48 = vld [vmem:[%s47] sm:$0x1]
    %49 = vrot.lane.b32.xlu0 %v48, 64
    %v50 = vpop.permute.xlu0 %49
    %vm51 = vcmask 589312
    %52 = vst.msk [vmem:[#allocation0] sm:$0x1] %vm51, %v50
    %s53 = scalar_lea.vmem %s0, 7
    %v54 = vld [vmem:[%s53] sm:$0x1]
    %55 = vrot.lane.b32.xlu0 %v54, 56
    %v56 = vpop.permute.xlu0 %55
    %vm57 = vcmask 523712
    %58 = vst.msk [vmem:[#allocation0] sm:$0x1] %vm57, %v56
    %s59 = scalar_lea.vmem %s0, 6
    %v60 = vld [vmem:[%s59] sm:$0x1]
    %61 = vrot.lane.b32.xlu0 %v60, 48
    %v62 = vpop.permute.xlu0 %61
    %vm63 = vcmask 458112
    %64 = vst.msk [vmem:[#allocation0] sm:$0x1] %vm63, %v62
    %s65 = scalar_lea.vmem %s0, 5
    %v66 = vld [vmem:[%s65] sm:$0x1]
    %67 = vrot.lane.b32.xlu0 %v66, 40
    %v68 = vpop.permute.xlu0 %67
    %vm69 = vcmask 392512
    %70 = vst.msk [vmem:[#allocation0] sm:$0x1] %vm69, %v68
    %s71 = scalar_lea.vmem %s0, 4
    %v72 = vld [vmem:[%s71] sm:$0x1]
    %73 = vrot.lane.b32.xlu0 %v72, 32
    %v74 = vpop.permute.xlu0 %73
    %vm75 = vcmask 326912
    %76 = vst.msk [vmem:[#allocation0] sm:$0x1] %vm75, %v74
    %s77 = scalar_lea.vmem %s0, 3
    %v78 = vld [vmem:[%s77] sm:$0x1]
    %79 = vrot.lane.b32.xlu0 %v78, 24
    %v80 = vpop.permute.xlu0 %79
    %vm81 = vcmask 261312
    %82 = vst.msk [vmem:[#allocation0] sm:$0x1] %vm81, %v80
    %s83 = scalar_lea.vmem %s0, 2
    %v84 = vld [vmem:[%s83] sm:$0x1]
    %85 = vrot.lane.b32.xlu0 %v84, 16
    %v86 = vpop.permute.xlu0 %85
    %vm87 = vcmask 195712
    %88 = vst.msk [vmem:[#allocation0] sm:$0x1] %vm87, %v86
    %s89 = scalar_lea.vmem %s0, 1
    %v90 = vld [vmem:[%s89] sm:$0x1]
    %91 = vrot.lane.b32.xlu0 %v90, 8
    %v92 = vpop.permute.xlu0 %91
    %vm93 = vcmask 130112
    %94 = vst.msk [vmem:[#allocation0] sm:$0x1] %vm93, %v92
    %s96 = ssub.s32 2, 1
    %v97 = vld [vmem:[#allocation0] sm:%s96]
    %s99 = ssub.s32 2, 1
    %100 = vst [vmem:[%s1] sm:%s99] %v97

// kernel: output_convolution_block.1
$region0: #{output_convolution_block.1}
  #allocation0 [shape = 'u32[]', space=smem, size = 0x4, offset = 0x4, fixed_abs, tag = 'smem constant byte address 0x4 - core index']
  #allocation1 [shape = 'u32[72,128]{1,0:T(1,128)}', space=vmem, size = 0x9000, scoped, tag = 'internal scratch']
  %s0 = inlined_call_operand.vmem [shape: f32[2,18,72], index: 0, kind: input, shape index: {}]
  %s1 = inlined_call_operand.vmem [shape: f32[3,72,128], index: 1, kind: input, shape index: {}]
  %s2 = inlined_call_operand.vmem [shape: f32[1,128], index: 2, kind: input, shape index: {}]
  %s3 = inlined_call_operand.vmem [shape: f32[2,16,128], index: 3, kind: output, shape index: {0}]
  %s4 = inlined_call_operand.vmem [shape: f32[1,2,128], index: 4, kind: output, shape index: {1}]
  %5 = xla_tuple %s3, %s4
  %s6 = sld [smem:[#allocation0]]
  $region30: #{output_convolution_block.1} parent=0
    _
  %s8 = ssub.s32 1, %s6
  %s9 = scalar_select 0, %s8, %s6
  // Predicated region
  $region2: #{output_convolution_block.1} parent=0 // pred_check
    _
  $region3: #{output_convolution_block.1} parent=0 // pred_check_branch
    %11 = sbr.rel (0) target = $region5
  $region4: #{output_convolution_block.1} parent=0 // pred_region
    _
  $region5: #{output_convolution_block.1} parent=0 // pred_fallthru
    _
  // Predicated region
  $region6: #{output_convolution_block.1} parent=0 // pred_check
    _
  $region7: #{output_convolution_block.1} parent=0 // pred_check_branch
    %13 = sbr.rel (0) target = $region9
  $region8: #{output_convolution_block.1} parent=0 // pred_region
    _
  $region9: #{output_convolution_block.1} parent=0 // pred_fallthru
    _
  // Predicated region
  $region10: #{output_convolution_block.1} parent=0 // pred_check
    _
  $region11: #{output_convolution_block.1} parent=0 // pred_check_branch
    %15 = sbr.rel (0) target = $region13
  $region12: #{output_convolution_block.1} parent=0 // pred_region
    _
  $region13: #{output_convolution_block.1} parent=0 // pred_fallthru
    _
  %v16 = vld [vmem:[%s0] sm:$0xff]
  %v17 = vld [vmem:[%s0 + $0x8] sm:$0xff]
  %v18 = vld [vmem:[%s1] sm:$0xff]
  %v19 = vld [vmem:[%s1 + $0x8] sm:$0xff]
  %v20 = vld [vmem:[%s1 + $0x10] sm:$0xff]
  %v21 = vld [vmem:[%s1 + $0x18] sm:$0xff]
  %v22 = vld [vmem:[%s1 + $0x20] sm:$0xff]
  %v23 = vld [vmem:[%s1 + $0x28] sm:$0xff]
  %v24 = vld [vmem:[%s1 + $0x30] sm:$0xff]
  %v25 = vld [vmem:[%s1 + $0x38] sm:$0xff]
  %v26 = vld [vmem:[%s1 + $0x40] sm:$0xff]
  %v27 = vld [vmem:[%s0 + $0x1] sm:$0xff]
  %v28 = vld [vmem:[%s0 + $0x9] sm:$0xff]
  %s29 = scalar_lea.vmem %s1, 72
  %v30 = vld [vmem:[%s29] sm:$0xff]
  %v31 = vld [vmem:[%s29 + $0x8] sm:$0xff]
  %v32 = vld [vmem:[%s29 + $0x10] sm:$0xff]
  %v33 = vld [vmem:[%s29 + $0x18] sm:$0xff]
  %v34 = vld [vmem:[%s29 + $0x20] sm:$0xff]
  %v35 = vld [vmem:[%s29 + $0x28] sm:$0xff]
  %v36 = vld [vmem:[%s29 + $0x30] sm:$0xff]
  %v37 = vld [vmem:[%s29 + $0x38] sm:$0xff]
  %v38 = vld [vmem:[%s29 + $0x40] sm:$0xff]
  %vm39 = vcmask 588800
  %v41 = vsel %vm39, %v27, 0
  %v44 = vsel %vm39, %v28, 0
  %46 = vmatpush.msra.mxu0 0.0
  %47 = vmatpush.msra.mxu0 0.0
  %48 = vmatpush.msra.mxu0 0.0
  %49 = vmatpush.msra.mxu0 0.0
  %50 = vmatpush.msra.mxu0 0.0
  %51 = vmatpush.msra.mxu0 0.0
  %52 = vmatpush.msra.mxu0 0.0
  %53 = vmatpush.msra.mxu0 %v38
  %54 = vmatpush.msra.mxu0 %v37
  %55 = vmatpush.msra.mxu0 %v36
  %56 = vmatpush.msra.mxu0 %v35
  %57 = vmatpush.msra.mxu0 %v34
  %58 = vmatpush.msra.mxu0 %v33
  %59 = vmatpush.msra.mxu0 %v32
  %60 = vmatpush.msra.mxu0 %v31
  %61 = vmatpush.msra.mxu0 %v30
  %62 = vmatmul.f32.gmra.mxu0 %v41
  %v63 = vpop.f32.mrf.mxu0
  %v64 = vadd.f32 0.0, %v63
  %65 = vmatmul.f32.gmra.mxu0 %v44
  %v66 = vpop.f32.mrf.mxu0
  %v67 = vadd.f32 0.0, %v66
  %68 = vdwg.mxu0
  %v70 = vsel %vm39, %v16, 0
  %v73 = vsel %vm39, %v17, 0
  %75 = vmatpush.msra.mxu0 0.0
  %76 = vmatpush.msra.mxu0 0.0
  %77 = vmatpush.msra.mxu0 0.0
  %78 = vmatpush.msra.mxu0 0.0
  %79 = vmatpush.msra.mxu0 0.0
  %80 = vmatpush.msra.mxu0 0.0
  %81 = vmatpush.msra.mxu0 0.0
  %82 = vmatpush.msra.mxu0 %v26
  %83 = vmatpush.msra.mxu0 %v25
  %84 = vmatpush.msra.mxu0 %v24
  %85 = vmatpush.msra.mxu0 %v23
  %86 = vmatpush.msra.mxu0 %v22
  %87 = vmatpush.msra.mxu0 %v21
  %88 = vmatpush.msra.mxu0 %v20
  %89 = vmatpush.msra.mxu0 %v19
  %90 = vmatpush.msra.mxu0 %v18
  %91 = vmatmul.f32.gmra.mxu0 %v70
  %v92 = vpop.f32.mrf.mxu0
  %v93 = vadd.f32 %v64, %v92
  %94 = vmatmul.f32.gmra.mxu0 %v73
  %v95 = vpop.f32.mrf.mxu0
  %v96 = vadd.f32 %v67, %v95
  %97 = vdwg.mxu0
  %v98 = vld [vmem:[%s0 + $0x2] sm:$0xff]
  %v99 = vld [vmem:[%s0 + $0xa] sm:$0xff]
  %s100 = scalar_lea.vmem %s1, 144
  %v101 = vld [vmem:[%s100] sm:$0xff]
  %v102 = vld [vmem:[%s100 + $0x8] sm:$0xff]
  %v103 = vld [vmem:[%s100 + $0x10] sm:$0xff]
  %v104 = vld [vmem:[%s100 + $0x18] sm:$0xff]
  %v105 = vld [vmem:[%s100 + $0x20] sm:$0xff]
  %v106 = vld [vmem:[%s100 + $0x28] sm:$0xff]
  %v107 = vld [vmem:[%s100 + $0x30] sm:$0xff]
  %v108 = vld [vmem:[%s100 + $0x38] sm:$0xff]
  %v109 = vld [vmem:[%s100 + $0x40] sm:$0xff]
  %v111 = vsel %vm39, %v98, 0
  %v114 = vsel %vm39, %v99, 0
  %116 = vmatpush.msra.mxu0 0.0
  %117 = vmatpush.msra.mxu0 0.0
  %118 = vmatpush.msra.mxu0 0.0
  %119 = vmatpush.msra.mxu0 0.0
  %120 = vmatpush.msra.mxu0 0.0
  %121 = vmatpush.msra.mxu0 0.0
  %122 = vmatpush.msra.mxu0 0.0
  %123 = vmatpush.msra.mxu0 %v109
  %124 = vmatpush.msra.mxu0 %v108
  %125 = vmatpush.msra.mxu0 %v107
  %126 = vmatpush.msra.mxu0 %v106
  %127 = vmatpush.msra.mxu0 %v105
  %128 = vmatpush.msra.mxu0 %v104
  %129 = vmatpush.msra.mxu0 %v103
  %130 = vmatpush.msra.mxu0 %v102
  %131 = vmatpush.msra.mxu0 %v101
  %132 = vmatmul.f32.gmra.mxu0 %v111
  %v133 = vpop.f32.mrf.mxu0
  %v134 = vadd.f32 0.0, %v133
  %135 = vmatmul.f32.gmra.mxu0 %v114
  %v136 = vpop.f32.mrf.mxu0
  %v137 = vadd.f32 0.0, %v136
  %138 = vdwg.mxu0
  %v139 = vadd.f32 %v93, %v134
  %v140 = vadd.f32 %v96, %v137
  %v141 = vld [vmem:[%s2] sm:$0x1]
  %v143 = vperm.slane %v141, 0
  %v145 = vadd.f32 %v139, %v143
  %v146 = vadd.f32 %v140, %v143
  %v147 = vmax.f32 %v145, 0.0
  %v148 = vmax.f32 %v146, 0.0
  %149 = vst [vmem:[%s3] sm:$0xff] %v147
  %150 = vst [vmem:[%s3 + $0x8] sm:$0xff] %v148
  %v151 = vadd.f32 %v147, %v148
  %v152 = vrot.slane %v151, 4
  %v153 = vadd.f32 %v151, %v152
  %v154 = vrot.slane %v153, 2
  %v155 = vadd.f32 %v153, %v154
  %v156 = vrot.slane %v155, 1
  %v157 = vadd.f32 %v155, %v156
  %v158 = vadd.f32 %v157, 0.0
  %v159 = vmul.f32 %v147, %v147
  %v160 = vmul.f32 %v148, %v148
  %v161 = vadd.f32 %v159, %v160
  %v162 = vrot.slane %v161, 4
  %v163 = vadd.f32 %v161, %v162
  %v164 = vrot.slane %v163, 2
  %v165 = vadd.f32 %v163, %v164
  %v166 = vrot.slane %v165, 1
  %v167 = vadd.f32 %v165, %v166
  %v168 = vadd.f32 %v167, 0.0
  %s169 = scalar_lea.vmem %s0, 24
  %v170 = vld [vmem:[%s169] sm:$0xff]
  %v171 = vld [vmem:[%s169 + $0x8] sm:$0xff]
  %v172 = vld [vmem:[%s1] sm:$0xff]
  %v173 = vld [vmem:[%s1 + $0x8] sm:$0xff]
  %v174 = vld [vmem:[%s1 + $0x10] sm:$0xff]
  %v175 = vld [vmem:[%s1 + $0x18] sm:$0xff]
  %v176 = vld [vmem:[%s1 + $0x20] sm:$0xff]
  %v177 = vld [vmem:[%s1 + $0x28] sm:$0xff]
  %v178 = vld [vmem:[%s1 + $0x30] sm:$0xff]
  %v179 = vld [vmem:[%s1 + $0x38] sm:$0xff]
  %v180 = vld [vmem:[%s1 + $0x40] sm:$0xff]
  %v181 = vld [vmem:[%s169 + $0x1] sm:$0xff]
  %v182 = vld [vmem:[%s169 + $0x9] sm:$0xff]
  %v183 = vld [vmem:[%s29] sm:$0xff]
  %v184 = vld [vmem:[%s29 + $0x8] sm:$0xff]
  %v185 = vld [vmem:[%s29 + $0x10] sm:$0xff]
  %v186 = vld [vmem:[%s29 + $0x18] sm:$0xff]
  %v187 = vld [vmem:[%s29 + $0x20] sm:$0xff]
  %v188 = vld [vmem:[%s29 + $0x28] sm:$0xff]
  %v189 = vld [vmem:[%s29 + $0x30] sm:$0xff]
  %v190 = vld [vmem:[%s29 + $0x38] sm:$0xff]
  %v191 = vld [vmem:[%s29 + $0x40] sm:$0xff]
  %v193 = vsel %vm39, %v181, 0
  %v196 = vsel %vm39, %v182, 0
  %198 = vmatpush.msra.mxu0 0.0
  %199 = vmatpush.msra.mxu0 0.0
  %200 = vmatpush.msra.mxu0 0.0
  %201 = vmatpush.msra.mxu0 0.0
  %202 = vmatpush.msra.mxu0 0.0
  %203 = vmatpush.msra.mxu0 0.0
  %204 = vmatpush.msra.mxu0 0.0
  %205 = vmatpush.msra.mxu0 %v191
  %206 = vmatpush.msra.mxu0 %v190
  %207 = vmatpush.msra.mxu0 %v189
  %208 = vmatpush.msra.mxu0 %v188
  %209 = vmatpush.msra.mxu0 %v187
  %210 = vmatpush.msra.mxu0 %v186
  %211 = vmatpush.msra.mxu0 %v185
  %212 = vmatpush.msra.mxu0 %v184
  %213 = vmatpush.msra.mxu0 %v183
  %214 = vmatmul.f32.gmra.mxu0 %v193
  %v215 = vpop.f32.mrf.mxu0
  %v216 = vadd.f32 0.0, %v215
  %217 = vmatmul.f32.gmra.mxu0 %v196
  %v218 = vpop.f32.mrf.mxu0
  %v219 = vadd.f32 0.0, %v218
  %220 = vdwg.mxu0
  %v222 = vsel %vm39, %v170, 0
  %v225 = vsel %vm39, %v171, 0
  %227 = vmatpush.msra.mxu0 0.0
  %228 = vmatpush.msra.mxu0 0.0
  %229 = vmatpush.msra.mxu0 0.0
  %230 = vmatpush.msra.mxu0 0.0
  %231 = vmatpush.msra.mxu0 0.0
  %232 = vmatpush.msra.mxu0 0.0
  %233 = vmatpush.msra.mxu0 0.0
  %234 = vmatpush.msra.mxu0 %v180
  %235 = vmatpush.msra.mxu0 %v179
  %236 = vmatpush.msra.mxu0 %v178
  %237 = vmatpush.msra.mxu0 %v177
  %238 = vmatpush.msra.mxu0 %v176
  %239 = vmatpush.msra.mxu0 %v175
  %240 = vmatpush.msra.mxu0 %v174
  %241 = vmatpush.msra.mxu0 %v173
  %242 = vmatpush.msra.mxu0 %v172
  %243 = vmatmul.f32.gmra.mxu0 %v222
  %v244 = vpop.f32.mrf.mxu0
  %v245 = vadd.f32 %v216, %v244
  %246 = vmatmul.f32.gmra.mxu0 %v225
  %v247 = vpop.f32.mrf.mxu0
  %v248 = vadd.f32 %v219, %v247
  %249 = vdwg.mxu0
  %v250 = vld [vmem:[%s169 + $0x2] sm:$0xff]
  %v251 = vld [vmem:[%s169 + $0xa] sm:$0xff]
  %v252 = vld [vmem:[%s100] sm:$0xff]
  %v253 = vld [vmem:[%s100 + $0x8] sm:$0xff]
  %v254 = vld [vmem:[%s100 + $0x10] sm:$0xff]
  %v255 = vld [vmem:[%s100 + $0x18] sm:$0xff]
  %v256 = vld [vmem:[%s100 + $0x20] sm:$0xff]
  %v257 = vld [vmem:[%s100 + $0x28] sm:$0xff]
  %v258 = vld [vmem:[%s100 + $0x30] sm:$0xff]
  %v259 = vld [vmem:[%s100 + $0x38] sm:$0xff]
  %v260 = vld [vmem:[%s100 + $0x40] sm:$0xff]
  %v262 = vsel %vm39, %v250, 0
  %v265 = vsel %vm39, %v251, 0
  %267 = vmatpush.msra.mxu0 0.0
  %268 = vmatpush.msra.mxu0 0.0
  %269 = vmatpush.msra.mxu0 0.0
  %270 = vmatpush.msra.mxu0 0.0
  %271 = vmatpush.msra.mxu0 0.0
  %272 = vmatpush.msra.mxu0 0.0
  %273 = vmatpush.msra.mxu0 0.0
  %274 = vmatpush.msra.mxu0 %v260
  %275 = vmatpush.msra.mxu0 %v259
  %276 = vmatpush.msra.mxu0 %v258
  %277 = vmatpush.msra.mxu0 %v257
  %278 = vmatpush.msra.mxu0 %v256
  %279 = vmatpush.msra.mxu0 %v255
  %280 = vmatpush.msra.mxu0 %v254
  %281 = vmatpush.msra.mxu0 %v253
  %282 = vmatpush.msra.mxu0 %v252
  %283 = vmatmul.f32.gmra.mxu0 %v262
  %v284 = vpop.f32.mrf.mxu0
  %v285 = vadd.f32 0.0, %v284
  %286 = vmatmul.f32.gmra.mxu0 %v265
  %v287 = vpop.f32.mrf.mxu0
  %v288 = vadd.f32 0.0, %v287
  %289 = vdwg.mxu0
  %v290 = vadd.f32 %v245, %v285
  %v291 = vadd.f32 %v248, %v288
  %v292 = vld [vmem:[%s2] sm:$0x1]
  %v294 = vperm.slane %v292, 0
  %v296 = vadd.f32 %v290, %v294
  %v297 = vadd.f32 %v291, %v294
  %v298 = vmax.f32 %v296, 0.0
  %v299 = vmax.f32 %v297, 0.0
  %s300 = scalar_lea.vmem %s3, 16
  %301 = vst [vmem:[%s300] sm:$0xff] %v298
  %302 = vst [vmem:[%s300 + $0x8] sm:$0xff] %v299
  %v303 = vadd.f32 %v298, %v299
  %v304 = vrot.slane %v303, 4
  %v305 = vadd.f32 %v303, %v304
  %v306 = vrot.slane %v305, 2
  %v307 = vadd.f32 %v305, %v306
  %v308 = vrot.slane %v307, 1
  %v309 = vadd.f32 %v307, %v308
  %v310 = vadd.f32 %v158, %v309
  %v311 = vmul.f32 %v298, %v298
  %v312 = vmul.f32 %v299, %v299
  %v313 = vadd.f32 %v311, %v312
  %v314 = vrot.slane %v313, 4
  %v315 = vadd.f32 %v313, %v314
  %v316 = vrot.slane %v315, 2
  %v317 = vadd.f32 %v315, %v316
  %v318 = vrot.slane %v317, 1
  %v319 = vadd.f32 %v317, %v318
  %v320 = vadd.f32 %v168, %v319
  %vm321 = vcmask 1040384
  %v322 = vsel %vm321, %v310, %v320
  %323 = vst [vmem:[%s4] sm:$0x3] %v322
  // Predicated region
  $region14: #{output_convolution_block.1} parent=0 // pred_check
    _
  $region15: #{output_convolution_block.1} parent=0 // pred_check_branch
    %325 = sbr.rel (0) target = $region17
  $region16: #{output_convolution_block.1} parent=0 // pred_region
    _
  $region17: #{output_convolution_block.1} parent=0 // pred_fallthru
    _
  // Predicated region
  $region18: #{output_convolution_block.1} parent=0 // pred_check
    _
  $region19: #{output_convolution_block.1} parent=0 // pred_check_branch
    %327 = sbr.rel (0) target = $region21
  $region20: #{output_convolution_block.1} parent=0 // pred_region
    _
  $region21: #{output_convolution_block.1} parent=0 // pred_fallthru
    _
  // Predicated region
  $region22: #{output_convolution_block.1} parent=0 // pred_check
    _
  $region23: #{output_convolution_block.1} parent=0 // pred_check_branch
    %329 = sbr.rel (0) target = $region25
  $region24: #{output_convolution_block.1} parent=0 // pred_region
    _
  $region25: #{output_convolution_block.1} parent=0 // pred_fallthru
    _
  // Predicated region
  $region26: #{output_convolution_block.1} parent=0 // pred_check
    _
  $region27: #{output_convolution_block.1} parent=0 // pred_check_branch
    %331 = sbr.rel (0) target = $region29
  $region28: #{output_convolution_block.1} parent=0 // pred_region
    _
  $region29: #{output_convolution_block.1} parent=0 // pred_fallthru
    _

</llo_original>
